<compile_context>
chip_gen: v5e
topology: v5e:2x2
jax: 0.10.0
libtpu: 0.0.40
codegen_flags: <defaults>
</compile_context>

<pallas_src>
import functools

import jax
import jax.numpy as jnp
from jax import lax
from jax.experimental import pallas as pl
from jax.experimental.pallas import tpu as pltpu


def _round_up(x, m):
    return ((x + m - 1) // m) * m


def _vmem_capacity_bytes():
    try:
        return int(pltpu.get_tpu_info().vmem_capacity_bytes)
    except Exception:  # conservative fallback = v7x per-core VMEM
        return 64 << 20


def _choose_tile_n(n, d_pad, itemsize, g_pad, budget_bytes):
    """Largest power-of-two row tile whose working set fits the VMEM budget."""
    n8 = max(_round_up(max(n, 1), 8), 8)
    tn = 8
    while tn < n8:
        nxt = tn * 2
        per_tile = (
            2 * 2 * nxt * d_pad * itemsize   # pred + gt, double-buffered
            + 2 * nxt * 128 * 4              # domain block (lane-padded int32)
            + 2 * nxt * g_pad * 4            # one-hot / temporaries
        )
        if per_tile > budget_bytes:
            break
        tn = nxt
    return min(tn, n8)


def _mean_loss_kernel(pred_ref, gt_ref, dom_ref, out_ref, sums_ref, counts_ref,
                      *, feat_dim):
    pid = pl.program_id(0)

    @pl.when(pid == 0)
    def _init():
        sums_ref[...] = jnp.zeros_like(sums_ref)
        counts_ref[...] = jnp.zeros_like(counts_ref)

    # Stream the native-dtype tile and upcast in-register (VPU casts are cheap;
    # HBM traffic stays at the input dtype width).
    diff = pred_ref[...].astype(jnp.float32) - gt_ref[...].astype(jnp.float32)
    per_sample = jnp.sum(diff * diff, axis=-1, keepdims=True)          # (TN, 1)

    tn = per_sample.shape[0]
    g_pad = sums_ref.shape[1]
    group_iota = lax.broadcasted_iota(jnp.int32, (tn, g_pad), 1)       # (TN, G_pad)
    onehot = (dom_ref[...] == group_iota).astype(jnp.float32)          # (TN, G_pad)

    # Per-group scatter-add via one-hot mask; cross-sublane reductions go to XLU.
    sums_ref[...] += jnp.sum(per_sample * onehot, axis=0, keepdims=True)
    counts_ref[...] += jnp.sum(onehot, axis=0, keepdims=True)

    @pl.when(pid == pl.num_programs(0) - 1)
    def _finalize():
        counts = counts_ref[...]
        sums = sums_ref[...]
        safe_counts = jnp.maximum(counts, 1.0)
        group_mse = sums / (safe_counts * jnp.float32(feat_dim))       # (1, G_pad)
        nonempty = (counts > 0.0).astype(jnp.float32)
        total_loss = jnp.sum(group_mse * nonempty)
        total_cnt = jnp.maximum(jnp.sum(nonempty), 1.0)                # NaN guard
        out_ref[0, 0] = total_loss / total_cnt


def mean_loss(pred, gt, domain, num_groups, tile_n=None):
    """pred, gt: (N, D) float; domain: (N,) ints with values in [0, num_groups)."""
    n, d = pred.shape
    d_pad = _round_up(d, 128)
    g_pad = _round_up(max(int(num_groups), 1), 128)
    itemsize = jnp.dtype(pred.dtype).itemsize

    vmem_cap = _vmem_capacity_bytes()
    if tile_n is None:
        tn = _choose_tile_n(n, d_pad, itemsize, g_pad, budget_bytes=vmem_cap // 4)
    else:
        tn = max(_round_up(int(tile_n), 8), 8)
    n_pad = _round_up(n, tn)

    if d_pad != d:
        pred = jnp.pad(pred, ((0, 0), (0, d_pad - d)))
        gt = jnp.pad(gt, ((0, 0), (0, d_pad - d)))
    dom2d = domain.reshape(n, 1).astype(jnp.int32)
    if n_pad != n:
        pred = jnp.pad(pred, ((0, n_pad - n), (0, 0)))
        gt = jnp.pad(gt, ((0, n_pad - n), (0, 0)))
        # Out-of-range id -> padded rows match no group and contribute nothing.
        dom2d = jnp.pad(dom2d, ((0, n_pad - n), (0, 0)), constant_values=-1)

    kernel = functools.partial(_mean_loss_kernel, feat_dim=d)
    out = pl.pallas_call(
        kernel,
        out_shape=jax.ShapeDtypeStruct((1, 1), jnp.float32),
        grid_spec=pltpu.PrefetchScalarGridSpec(
            num_scalar_prefetch=0,
            grid=(n_pad // tn,),
            in_specs=[
                pl.BlockSpec((tn, d_pad), lambda i: (i, 0)),   # pred tile
                pl.BlockSpec((tn, d_pad), lambda i: (i, 0)),   # gt tile
                pl.BlockSpec((tn, 1), lambda i: (i, 0)),       # domain ids
            ],
            out_specs=pl.BlockSpec((1, 1), lambda i: (0, 0),
                                   memory_space=pltpu.SMEM),
            scratch_shapes=[
                pltpu.VMEM((1, g_pad), jnp.float32),   # per-group sq-error sums
                pltpu.VMEM((1, g_pad), jnp.float32),   # per-group row counts
            ],
        ),
        compiler_params=pltpu.CompilerParams(
            dimension_semantics=("arbitrary",),        # cross-step accumulation
            vmem_limit_bytes=int(min(vmem_cap // 2, 96 << 20)),
        ),
    )(pred, gt, dom2d)
    return out[0, 0]


def mean_loss_ref(pred, gt, domain, num_groups):
    """Plain-JAX reference mirroring the PyTorch loop semantics."""
    pred = pred.astype(jnp.float32)
    gt = gt.astype(jnp.float32)
    total_loss, total_cnt = 0.0, 0.0
    for g in range(num_groups):
        mask = (domain == g)
        cnt = jnp.sum(mask)
        sq = jnp.sum(((pred - gt) ** 2) * mask[:, None])
        mse = jnp.where(cnt > 0, sq / jnp.maximum(cnt, 1) / pred.shape[1], 0.0)
        total_loss = total_loss + mse
        total_cnt = total_cnt + (cnt > 0).astype(jnp.float32)
    return total_loss / total_cnt


if __name__ == "__main__":
    key = jax.random.PRNGKey(0)
    keys = jax.random.split(key, 9)

    # 1) Small aligned case.
    N, D, G = 8, 32, 4
    pred = jax.random.normal(keys[0], (N, D), dtype=jnp.float32)
    gt = jax.random.normal(keys[1], (N, D), dtype=jnp.float32)
    domain = jax.random.randint(keys[2], (N,), 0, G, dtype=jnp.int32)
    out = mean_loss(pred, gt, domain, G)
    jax.block_until_ready(out)
    ref = mean_loss_ref(pred, gt, domain, G)
    assert jnp.allclose(out, ref, rtol=1e-5, atol=1e-5), (out, ref)

    # 2) Ragged case exercising the N / D padding path in the wrapper.
    N2, D2, G2 = 13, 40, 5
    pred2 = jax.random.normal(keys[3], (N2, D2), dtype=jnp.float32)
    gt2 = jax.random.normal(keys[4], (N2, D2), dtype=jnp.float32)
    domain2 = jax.random.randint(keys[5], (N2,), 0, G2, dtype=jnp.int32)
    out2 = mean_loss(pred2, gt2, domain2, G2)
    jax.block_until_ready(out2)
    ref2 = mean_loss_ref(pred2, gt2, domain2, G2)
    assert jnp.allclose(out2, ref2, rtol=1e-5, atol=1e-5), (out2, ref2)

    # 3) Multi-step bf16 case: forces several grid iterations (cross-step
    #    scratch accumulation) and exercises the in-kernel upcast path.
    N3, D3, G3 = 1024, 256, 7
    pred3 = jax.random.normal(keys[6], (N3, D3), dtype=jnp.float32).astype(jnp.bfloat16)
    gt3 = jax.random.normal(keys[7], (N3, D3), dtype=jnp.float32).astype(jnp.bfloat16)
    domain3 = jax.random.randint(keys[8], (N3,), 0, G3, dtype=jnp.int32)
    out3 = mean_loss(pred3, gt3, domain3, G3, tile_n=128)
    jax.block_until_ready(out3)
    ref3 = mean_loss_ref(pred3, gt3, domain3, G3)
    assert jnp.allclose(out3, ref3, rtol=1e-4, atol=1e-4), (out3, ref3)

    print("KERNEL_OK")
</pallas_src>

<mosaic_0001>
module attributes {stable_mosaic.version = 11 : i64} {
  func.func @_mean_loss_kernel(%arg0: i32, %arg1: memref<8x128xf32, #tpu.memory_space<vmem>>, %arg2: memref<8x128xf32, #tpu.memory_space<vmem>>, %arg3: memref<8x1xi32, #tpu.memory_space<vmem>>, %arg4: memref<1x1xf32, #tpu.memory_space<smem>>, %arg5: memref<1x128xf32, #tpu.memory_space<vmem>>, %arg6: memref<1x128xf32, #tpu.memory_space<vmem>>) attributes {dimension_semantics = [#tpu.dimension_semantics<arbitrary>], iteration_bounds = array<i64: 1>, scalar_prefetch = 0 : i64, scratch_operands = 2 : i64, tpu.core_type = #tpu.core_type<tc>, window_params = [{transform_indices = @transform_0, window_bounds = array<i64: 8, 128>}, {transform_indices = @transform_1, window_bounds = array<i64: 8, 128>}, {transform_indices = @transform_2, window_bounds = array<i64: 8, 1>}, {transform_indices = @transform_3, window_bounds = array<i64: 1, 1>}]} {
    %c0_i32 = arith.constant 0 : i32
    %0 = arith.cmpi eq, %arg0, %c0_i32 : i32
    %1 = arith.extui %0 : i1 to i32
    %c0_i32_0 = arith.constant 0 : i32
    %2 = arith.cmpi ne, %1, %c0_i32_0 : i32
    scf.if %2 {
      %cst_18 = arith.constant 0.000000e+00 : f32
      %30 = vector.broadcast %cst_18 : f32 to vector<1x128xf32>
      %c0_19 = arith.constant 0 : index
      %c0_20 = arith.constant 0 : index
      %31 = vector.load %arg5[%c0_19, %c0_20] : memref<1x128xf32, #tpu.memory_space<vmem>>, vector<1x128xf32>
      tpu.vector_store %arg5[%c0_19, %c0_20], %30 {strides = array<i32>} : memref<1x128xf32, #tpu.memory_space<vmem>>, vector<1x128xf32>,
      %cst_21 = arith.constant 0.000000e+00 : f32
      %32 = vector.broadcast %cst_21 : f32 to vector<1x128xf32>
      %c0_22 = arith.constant 0 : index
      %c0_23 = arith.constant 0 : index
      %33 = vector.load %arg6[%c0_22, %c0_23] : memref<1x128xf32, #tpu.memory_space<vmem>>, vector<1x128xf32>
      tpu.vector_store %arg6[%c0_22, %c0_23], %32 {strides = array<i32>} : memref<1x128xf32, #tpu.memory_space<vmem>>, vector<1x128xf32>,
    } else {
    }
    %c0 = arith.constant 0 : index
    %c0_1 = arith.constant 0 : index
    %3 = vector.load %arg1[%c0, %c0_1] : memref<8x128xf32, #tpu.memory_space<vmem>>, vector<8x128xf32>
    %c0_2 = arith.constant 0 : index
    %c0_3 = arith.constant 0 : index
    %4 = vector.load %arg2[%c0_2, %c0_3] : memref<8x128xf32, #tpu.memory_space<vmem>>, vector<8x128xf32>
    %5 = arith.subf %3, %4 : vector<8x128xf32>
    %6 = arith.mulf %5, %5 : vector<8x128xf32>
    %cst = arith.constant dense<0.000000e+00> : vector<8xf32>
    %7 = vector.multi_reduction <add>, %6, %cst [1] : vector<8x128xf32> to vector<8xf32>
    %8 = vector.shape_cast %7 : vector<8xf32> to vector<8x1xf32>
    %9 = tpu.iota {dimensions = array<i32: 1>} : vector<8x128xi32>
    %c0_4 = arith.constant 0 : index
    %c0_5 = arith.constant 0 : index
    %10 = vector.load %arg3[%c0_4, %c0_5] : memref<8x1xi32, #tpu.memory_space<vmem>>, vector<8x1xi32>
    %11 = vector.broadcast %10 : vector<8x1xi32> to vector<8x128xi32>
    %12 = arith.cmpi eq, %11, %9 : vector<8x128xi32>
    %13 = arith.extui %12 : vector<8x128xi1> to vector<8x128xi32>
    %14 = arith.sitofp %13 : vector<8x128xi32> to vector<8x128xf32>
    %c0_6 = arith.constant 0 : index
    %c0_7 = arith.constant 0 : index
    %15 = vector.load %arg5[%c0_6, %c0_7] : memref<1x128xf32, #tpu.memory_space<vmem>>, vector<1x128xf32>
    %16 = vector.broadcast %8 : vector<8x1xf32> to vector<8x128xf32>
    %17 = arith.mulf %16, %14 : vector<8x128xf32>
    %cst_8 = arith.constant dense<0.000000e+00> : vector<128xf32>
    %18 = vector.multi_reduction <add>, %17, %cst_8 [0] : vector<8x128xf32> to vector<128xf32>
    %19 = vector.shape_cast %18 : vector<128xf32> to vector<1x128xf32>
    %20 = arith.addf %15, %19 : vector<1x128xf32>
    %c0_9 = arith.constant 0 : index
    %c0_10 = arith.constant 0 : index
    %21 = vector.load %arg5[%c0_9, %c0_10] : memref<1x128xf32, #tpu.memory_space<vmem>>, vector<1x128xf32>
    tpu.vector_store %arg5[%c0_9, %c0_10], %20 {strides = array<i32>} : memref<1x128xf32, #tpu.memory_space<vmem>>, vector<1x128xf32>,
    %c0_11 = arith.constant 0 : index
    %c0_12 = arith.constant 0 : index
    %22 = vector.load %arg6[%c0_11, %c0_12] : memref<1x128xf32, #tpu.memory_space<vmem>>, vector<1x128xf32>
    %cst_13 = arith.constant dense<0.000000e+00> : vector<128xf32>
    %23 = vector.multi_reduction <add>, %14, %cst_13 [0] : vector<8x128xf32> to vector<128xf32>
    %24 = vector.shape_cast %23 : vector<128xf32> to vector<1x128xf32>
    %25 = arith.addf %22, %24 : vector<1x128xf32>
    %c0_14 = arith.constant 0 : index
    %c0_15 = arith.constant 0 : index
    %26 = vector.load %arg6[%c0_14, %c0_15] : memref<1x128xf32, #tpu.memory_space<vmem>>, vector<1x128xf32>
    tpu.vector_store %arg6[%c0_14, %c0_15], %25 {strides = array<i32>} : memref<1x128xf32, #tpu.memory_space<vmem>>, vector<1x128xf32>,
    %c0_i32_16 = arith.constant 0 : i32
    %27 = arith.cmpi eq, %arg0, %c0_i32_16 : i32
    %28 = arith.extui %27 : i1 to i32
    %c0_i32_17 = arith.constant 0 : i32
    %29 = arith.cmpi ne, %28, %c0_i32_17 : i32
    scf.if %29 {
      %c0_18 = arith.constant 0 : index
      %c0_19 = arith.constant 0 : index
      %30 = vector.load %arg6[%c0_18, %c0_19] : memref<1x128xf32, #tpu.memory_space<vmem>>, vector<1x128xf32>
      %c0_20 = arith.constant 0 : index
      %c0_21 = arith.constant 0 : index
      %31 = vector.load %arg5[%c0_20, %c0_21] : memref<1x128xf32, #tpu.memory_space<vmem>>, vector<1x128xf32>
      %cst_22 = arith.constant 1.000000e+00 : f32
      %32 = vector.broadcast %cst_22 : f32 to vector<1x128xf32>
      %33 = arith.maximumf %30, %32 : vector<1x128xf32>
      %cst_23 = arith.constant 3.200000e+01 : f32
      %34 = vector.broadcast %cst_23 : f32 to vector<1x128xf32>
      %35 = arith.mulf %33, %34 : vector<1x128xf32>
      %36 = arith.divf %31, %35 : vector<1x128xf32>
      %cst_24 = arith.constant 0.000000e+00 : f32
      %37 = vector.broadcast %cst_24 : f32 to vector<1x128xf32>
      %38 = arith.cmpf ogt, %30, %37 : vector<1x128xf32>
      %39 = arith.extui %38 : vector<1x128xi1> to vector<1x128xi32>
      %40 = arith.sitofp %39 : vector<1x128xi32> to vector<1x128xf32>
      %41 = arith.mulf %36, %40 : vector<1x128xf32>
      %42 = vector.shape_cast %41 : vector<1x128xf32> to vector<1x1x128xf32>
      %cst_25 = arith.constant dense<0.000000e+00> : vector<1xf32>
      %43 = vector.multi_reduction <add>, %42, %cst_25 [1, 2] : vector<1x1x128xf32> to vector<1xf32>
      %44 = vector.shape_cast %43 : vector<1xf32> to vector<1x1x1xf32>
      %45 = vector.extract %44[0, 0, 0] : f32 from vector<1x1x1xf32>
      %46 = vector.shape_cast %40 : vector<1x128xf32> to vector<1x1x128xf32>
      %cst_26 = arith.constant dense<0.000000e+00> : vector<1xf32>
      %47 = vector.multi_reduction <add>, %46, %cst_26 [1, 2] : vector<1x1x128xf32> to vector<1xf32>
      %48 = vector.shape_cast %47 : vector<1xf32> to vector<1x1x1xf32>
      %49 = vector.extract %48[0, 0, 0] : f32 from vector<1x1x1xf32>
      %cst_27 = arith.constant 1.000000e+00 : f32
      %50 = arith.maximumf %49, %cst_27 : f32
      %51 = arith.divf %45, %50 : f32
      %c0_28 = arith.constant 0 : index
      %c0_29 = arith.constant 0 : index
      %52 = memref.load %arg4[%c0_28, %c0_29] : memref<1x1xf32, #tpu.memory_space<smem>>
      memref.store %51, %arg4[%c0_28, %c0_29] : memref<1x1xf32, #tpu.memory_space<smem>>
    } else {
    }
    return
  }
  func.func @transform_0(%arg0: i32) -> (i32, i32) {
    %c0_i32 = arith.constant 0 : i32
    %c0_i32_0 = arith.constant 0 : i32
    return %arg0, %c0_i32 : i32, i32
  }
  func.func @transform_1(%arg0: i32) -> (i32, i32) {
    %c0_i32 = arith.constant 0 : i32
    %c0_i32_0 = arith.constant 0 : i32
    return %arg0, %c0_i32 : i32, i32
  }
  func.func @transform_2(%arg0: i32) -> (i32, i32) {
    %c0_i32 = arith.constant 0 : i32
    %c0_i32_0 = arith.constant 0 : i32
    return %arg0, %c0_i32 : i32, i32
  }
  func.func @transform_3(%arg0: i32) -> (i32, i32) {
    %c0_i32 = arith.constant 0 : i32
    %c0_i32_0 = arith.constant 0 : i32
    %c0_i32_1 = arith.constant 0 : i32
    return %c0_i32, %c0_i32_0 : i32, i32
  }
}

</mosaic_0001>

<llo_original>
// kernel: tpu_custom_call.1
$region0: #{tpu_custom_call.1}
  #allocation0 [shape = 'u32[]', space=smem, size = 0x4, offset = 0x4, fixed_abs, tag = 'smem constant byte address 0x4 - core index']
  #allocation1 [shape = 'u32[72,128]{1,0:T(1,128)}', space=vmem, size = 0x9000, scoped, tag = 'internal scratch']
  #allocation2 [shape = 'f32[1,128]{1,0:T(1,128)}', space=vmem, size = 0x200, scoped, tag = 'scratch operand']
  #allocation3 [shape = 'f32[1,128]{1,0:T(1,128)}', space=vmem, size = 0x200, scoped, tag = 'scratch operand']
  %s0 = inlined_call_operand.vmem [shape: f32[8,128], index: 0, kind: input, shape index: {}]
  %s1 = inlined_call_operand.hbm [shape: f32[8,128], index: 1, kind: input, shape index: {}]
  %s2 = inlined_call_operand.vmem [shape: s32[8,1], index: 2, kind: input, shape index: {}]
  %s3 = inlined_call_operand.hbm [shape: f32[1,1], index: 3, kind: output, shape index: {}]
  %s4 = sld [smem:[#allocation0]]
  $region34: #{tpu_custom_call.1} parent=0
    _
  %s6 = ssub.s32 1, %s4
  %s7 = scalar_select 0, %s6, %s4
  $region1: #{tpu_custom_call.1} parent=0
    #allocation4 [shape = 'u8[4096]{0}', space=vmem, size = 0x1000, scoped, tag = 'input window, operand 1, single buffered']
    #allocation5 [shape = 's32[1]{0}', space=sflag, size = 0x4, scoped, tag = 'scoped memory for tpu_custom_call.1']
    #allocation6 [shape = 's32[1]{0}', space=sflag, size = 0x4, scoped, tag = 'scoped memory for tpu_custom_call.1']
    #allocation7 [shape = 'u8[512]{0}', space=smem, size = 0x200, scoped, tag = 'output window, operand 0, single buffered']
    %8 = vsyncpa [#allocation5], 0
    %9 = vsyncpa [#allocation6], 0
    // Predicated region
    $region2: #{tpu_custom_call.1} parent=1 // pred_check
      _
    $region3: #{tpu_custom_call.1} parent=1 // pred_check_branch
      %11 = sbr.rel (0) target = $region5
    $region4: #{tpu_custom_call.1} parent=1 // pred_region
      _
    $region5: #{tpu_custom_call.1} parent=1 // pred_fallthru
      _
    // Predicated region
    $region6: #{tpu_custom_call.1} parent=1 // pred_check
      _
    $region7: #{tpu_custom_call.1} parent=1 // pred_check_branch
      %13 = sbr.rel (0) target = $region9
    $region8: #{tpu_custom_call.1} parent=1 // pred_region
      %15 = vsyncadd [#allocation5], 0
      %s17 = sshll.u32 %s1, 4
      %s18 = int_to_ptr.hbm [resolvable:$true] %s17
      %s19 = sshll.u32 [#allocation4], 4
      %s20 = int_to_ptr.vmem [resolvable:$true] %s19
      %22 = dma.hbm_to_vmem [thread:$0]  %s18, 128, %s20, [#allocation5]
    $region9: #{tpu_custom_call.1} parent=1 // pred_fallthru
      _
    // Predicated region
    $region10: #{tpu_custom_call.1} parent=1 // pred_check
      _
    $region11: #{tpu_custom_call.1} parent=1 // pred_check_branch
      %24 = sbr.rel (0) target = $region13
    $region12: #{tpu_custom_call.1} parent=1 // pred_region
      _
    $region13: #{tpu_custom_call.1} parent=1 // pred_fallthru
      _
    // Predicated region
    $region14: #{tpu_custom_call.1} parent=1 // pred_check
      _
    $region15: #{tpu_custom_call.1} parent=1 // pred_check_branch
      %26 = sbr.rel (0) target = $region17
    $region16: #{tpu_custom_call.1} parent=1 // pred_region
      %28 = dma.done [#allocation5], 128
    $region17: #{tpu_custom_call.1} parent=1 // pred_fallthru
      _
    %p29 = scmp.eq.s32.totalorder 0, 0
    // Predicated region
    $region18: #{tpu_custom_call.1} parent=1 // pred_check
      %p30 = pneg %p29
    $region19: #{tpu_custom_call.1} parent=1 // pred_check_branch
      %32 = sbr.rel (%p30) target = $region21
    $region20: #{tpu_custom_call.1} parent=1 // pred_region
      %33 = vst [vmem:[#allocation2] sm:$0x1] 0.0
      %34 = vst [vmem:[#allocation3] sm:$0x1] 0.0
    $region21: #{tpu_custom_call.1} parent=1 // pred_fallthru
      _
    %v35 = vld [vmem:[%s0] sm:$0xff]
    %v36 = vld [vmem:[#allocation4] sm:$0xff]
    %v37 = vsub.f32 %v35, %v36
    %v38 = vmul.f32 %v37, %v37
    %39 = vadd.xlane.f32.xlu0 %v38
    %v40 = vpop.xlane.xlu0 %39
    %v41 = vlaneseq
    %v42 = vand.u32 %v41, 127
    %v43 = vld [vmem:[%s2] sm:$0xff]
    %44 = vset.pattern.permute.xlu0 0
    %45 = vperm.xlu0 %44, %v43
    %v46 = vpop.permute.xlu0 %45
    %vm47 = vcmp.eq.s32.totalorder %v46, %v42
    %v48 = vsel %vm47, 1, 0
    %v49 = vcvt.s32.f32 %v48
    %v50 = vld [vmem:[#allocation2] sm:$0x1]
    %v51 = vmul.f32 %v40, %v49
    %v52 = vrot.slane %v51, 4
    %v53 = vadd.f32 %v51, %v52
    %v54 = vrot.slane %v53, 2
    %v55 = vadd.f32 %v53, %v54
    %v56 = vrot.slane %v55, 1
    %v57 = vadd.f32 %v55, %v56
    %v58 = vadd.f32 %v50, %v57
    %59 = vst [vmem:[#allocation2] sm:$0x1] %v58
    %v60 = vld [vmem:[#allocation3] sm:$0x1]
    %v61 = vrot.slane %v49, 4
    %v62 = vadd.f32 %v49, %v61
    %v63 = vrot.slane %v62, 2
    %v64 = vadd.f32 %v62, %v63
    %v65 = vrot.slane %v64, 1
    %v66 = vadd.f32 %v64, %v65
    %v67 = vadd.f32 %v60, %v66
    %68 = vst [vmem:[#allocation3] sm:$0x1] %v67
    // Predicated region
    $region22: #{tpu_custom_call.1} parent=1 // pred_check
      %p69 = pneg %p29
    $region23: #{tpu_custom_call.1} parent=1 // pred_check_branch
      %71 = sbr.rel (%p69) target = $region25
    $region24: #{tpu_custom_call.1} parent=1 // pred_region
      %v72 = vld [vmem:[#allocation3] sm:$0x1]
      %v73 = vld [vmem:[#allocation2] sm:$0x1]
      %v74 = vmax.f32 %v72, 1.0
      %v75 = vmul.f32 %v74, 32.0
      %v76 = vrcp.pop %v75
      %v77 = vmul.f32 %v75, %v76
      %v78 = vsub.f32 1.0, %v77
      %v79 = vmul.f32 %v76, %v78
      %v80 = vadd.f32 %v76, %v79
      %vm81 = vweird.f32 %v75
      %vm82 = vweird.f32 %v76
      %vm83 = vmor %vm81, %vm82
      %v84 = vsel %vm83, %v76, %v80
      %v85 = vand.u32 2147483647, %v75
      %vm86 = vcmp.eq.f32.partialorder %v85, 8.507059e+37
      %v87 = vand.u32 %v75, 2147483648
      %v88 = vor.u32 1.1754944e-38, %v87
      %v89 = vsel %vm86, %v88, %v84
      %v90 = vmul.f32 %v73, %v89
      %vm91 = vcmp.gt.f32.partialorder %v72, 0.0
      %v92 = vsel %vm91, 1, 0
      %v93 = vcvt.s32.f32 %v92
      %v94 = vmul.f32 %v90, %v93
      %vm95 = vcmask 1040384
      %v96 = vsel %vm95, %v94, 0.0
      %97 = vadd.xlane.f32.xlu0 %v96
      %v98 = vpop.xlane.xlu0 %97
      %v99 = vrot.slane %v98, 4
      %v100 = vadd.f32 %v98, %v99
      %v101 = vrot.slane %v100, 2
      %v102 = vadd.f32 %v100, %v101
      %v103 = vrot.slane %v102, 1
      %v104 = vadd.f32 %v102, %v103
      %s105 = vtos %v104
      %v106 = vsel %vm95, %v93, 0.0
      %107 = vadd.xlane.f32.xlu0 %v106
      %v108 = vpop.xlane.xlu0 %107
      %v109 = vrot.slane %v108, 4
      %v110 = vadd.f32 %v108, %v109
      %v111 = vrot.slane %v110, 2
      %v112 = vadd.f32 %v110, %v111
      %v113 = vrot.slane %v112, 1
      %v114 = vadd.f32 %v112, %v113
      %s115 = vtos %v114
      %s116 = smax.f32 %s115, 1.0
      %v117 = vstv %s116
      %v118 = vrcp.pop %v117
      %v119 = vmul.f32 %v117, %v118
      %v120 = vsub.f32 1.0, %v119
      %v121 = vmul.f32 %v118, %v120
      %v122 = vadd.f32 %v118, %v121
      %vm123 = vweird.f32 %v117
      %vm124 = vweird.f32 %v118
      %vm125 = vmor %vm123, %vm124
      %v126 = vsel %vm125, %v118, %v122
      %v127 = vand.u32 2147483647, %v117
      %vm128 = vcmp.eq.f32.partialorder %v127, 8.507059e+37
      %v129 = vand.u32 %v117, 2147483648
      %v130 = vor.u32 1.1754944e-38, %v129
      %v131 = vsel %vm128, %v130, %v126
      %s132 = vtos %v131
      %s133 = smul.f32 %s105, %s132
      %s134 = scalar_lea.smem [#allocation7], 0
      %135 = sst [smem:[%s134]] %s133
    $region25: #{tpu_custom_call.1} parent=1 // pred_fallthru
      _
    // Predicated region
    $region26: #{tpu_custom_call.1} parent=1 // pred_check
      _
    $region27: #{tpu_custom_call.1} parent=1 // pred_check_branch
      %137 = sbr.rel (0) target = $region29
    $region28: #{tpu_custom_call.1} parent=1 // pred_region
      %139 = vsyncadd [#allocation6], 0
      %s141 = sshll.u32 %s3, 4
      %s142 = int_to_ptr.hbm [resolvable:$true] %s141
      %144 = dma.smem_to_hbm [#allocation7], 16, %s142, [#allocation6]
    $region29: #{tpu_custom_call.1} parent=1 // pred_fallthru
      _
    // Predicated region
    $region30: #{tpu_custom_call.1} parent=1 // pred_check
      _
    $region31: #{tpu_custom_call.1} parent=1 // pred_check_branch
      %146 = sbr.rel (0) target = $region33
    $region32: #{tpu_custom_call.1} parent=1 // pred_region
      %148 = dma.done [#allocation6], 16
    $region33: #{tpu_custom_call.1} parent=1 // pred_fallthru
      _
    %149 = sfence
    %150 = vsyncpa [#allocation5], 1
    %151 = vsyncpa [#allocation6], 1

</llo_original>
